<compile_context>
chip_gen: v5e
topology: v5e:2x2
jax: 0.10.0
libtpu: 0.0.40
codegen_flags: <defaults>
</compile_context>

<pallas_src>
import numpy as np
import jax
import jax.numpy as jnp
from jax.experimental import pallas as pl
from jax.experimental.pallas import tpu as pltpu


def _round_up(x, m):
    return ((x + m - 1) // m) * m


def _fused_linear_kernel(x_ref, w_ref, b_ref, o_ref):
    # x_ref: (tile_r, C)  w_ref: (C, Np)  b_ref: (1, Np)  o_ref: (tile_r, Np)
    acc = jnp.dot(x_ref[...], w_ref[...], preferred_element_type=jnp.float32)
    o_ref[...] = (acc + b_ref[...]).astype(o_ref.dtype)


def _fused_heads(x, w_slab, b_slab, *, tile_r=None, vmem_limit_bytes=None):
    """y = x @ w_slab + b_slab, tiled and pipelined over rows of x."""
    R, C = x.shape
    Cw, Np = w_slab.shape
    assert Cw == C and Np % 128 == 0

    itemsize = jnp.dtype(x.dtype).itemsize
    if tile_r is None:
        # ~4 MiB per x buffer (Pallas double-buffers it); multiple of 16 so the
        # second-to-last block dim is sublane-aligned for both f32 and bf16.
        tile_r = max(16, min(512, ((4 << 20) // (C * itemsize)) // 16 * 16))
    tile_r = min(tile_r, _round_up(R, 16))
    tile_r = _round_up(tile_r, 16)

    R_pad = _round_up(R, tile_r)
    if R_pad != R:
        x = jnp.pad(x, ((0, R_pad - R), (0, 0)))

    needed = (C * Np * jnp.dtype(w_slab.dtype).itemsize   # resident weight slab
              + Np * 4                                    # resident bias
              + 2 * tile_r * C * itemsize                 # double-buffered x tiles
              + 2 * tile_r * Np * 4)                      # double-buffered out tiles
    if vmem_limit_bytes is None:
        vmem_limit_bytes = int(min(48 << 20, max(16 << 20, needed * 2)))

    grid = (R_pad // tile_r,)
    out = pl.pallas_call(
        _fused_linear_kernel,
        out_shape=jax.ShapeDtypeStruct((R_pad, Np), jnp.float32),
        grid_spec=pltpu.PrefetchScalarGridSpec(
            num_scalar_prefetch=0,
            grid=grid,
            in_specs=[
                pl.BlockSpec((tile_r, C), lambda i: (i, 0)),   # x tile (pipelined)
                pl.BlockSpec((C, Np), lambda i: (0, 0)),       # weight slab (resident)
                pl.BlockSpec((1, Np), lambda i: (0, 0)),       # bias slab (resident)
            ],
            out_specs=pl.BlockSpec((tile_r, Np), lambda i: (i, 0)),
        ),
        compiler_params=pltpu.CompilerParams(
            dimension_semantics=("parallel",),   # megacore split on v7x
            vmem_limit_bytes=vmem_limit_bytes,
        ),
    )(x, w_slab, b_slab)
    return out[:R]


_HEAD_NAMES = ["ref1", "ref2", "ref3", "bbox_pred1", "bbox_pred2", "bbox_pred3"]


def gcn_predictor_forward(x1, x2, proposal_lens, params, training=False,
                          use_bf16_matmul=False):
    """Forward pass matching GCNPredictor.forward's returned tensors.

    x1: (R, C) ROI features (R = sum of proposal lengths)
    x2: (R, C2, H, W) or (R, C2) auxiliary features (pooled, then unused)
    """
    R, C = x1.shape
    assert sum(proposal_lens) == R

    # x2 avg-pool branch of the reference forward; result is unused downstream,
    # so it stays a cheap XLA reduction in the wrapper (not worth a kernel).
    if x2.ndim == 4:
        x2 = jnp.mean(x2, axis=(2, 3))
    assert x2.ndim == 2

    widths = [params[n]["w"].shape[0] for n in _HEAD_NAMES]
    n_total = sum(widths)
    n_pad = _round_up(n_total, 128)            # lane-dense single output slab

    # PyTorch Linear: y = x @ W.T + b with W:(out, C)  ->  slab (C, n_pad)
    w_slab = jnp.concatenate([params[n]["w"] for n in _HEAD_NAMES], axis=0).T
    b_slab = jnp.concatenate([params[n]["b"] for n in _HEAD_NAMES], axis=0)
    w_slab = jnp.pad(w_slab, ((0, 0), (0, n_pad - n_total)))
    b_slab = jnp.pad(b_slab, (0, n_pad - n_total)).reshape(1, n_pad)

    x_in = x1
    if use_bf16_matmul:                         # optional v6e/v7x bandwidth path
        x_in = x_in.astype(jnp.bfloat16)
        w_slab = w_slab.astype(jnp.bfloat16)

    out = _fused_heads(x_in, w_slab, b_slab)    # (R, n_pad) f32

    offs = np.cumsum([0] + widths)
    slabs = [out[:, int(offs[i]):int(offs[i + 1])] for i in range(len(_HEAD_NAMES))]
    ref_logits = slabs[0:3]
    bbox_preds = slabs[3:6]

    # TODO(synk): the per-image GAT/Sim_Net graph branch (cal_adj, GATConv x2,
    # node_linear softmax, attention-weighted graph scores, Mean/Softmax
    # aggregations, IPython.embed debug stops) relies on torch_geometric and
    # submodules not defined in the reference; no clean Pallas equivalent, so
    # the graph/node score lists are returned empty.
    graph_score_list = []
    node_score_list = []

    return [], [], graph_score_list, node_score_list, ref_logits, bbox_preds


def init_params(key, in_channels, num_classes, cls_agnostic_bbox_reg=False):
    """nn.init.normal_(W, std=0.001), bias=0 for every Linear head."""
    num_bbox_reg_classes = 2 if cls_agnostic_bbox_reg else num_classes
    out_dims = {
        "ref1": num_classes, "ref2": num_classes, "ref3": num_classes,
        "bbox_pred1": num_bbox_reg_classes * 4,
        "bbox_pred2": num_bbox_reg_classes * 4,
        "bbox_pred3": num_bbox_reg_classes * 4,
    }
    params = {}
    for i, (n, d) in enumerate(out_dims.items()):
        k = jax.random.fold_in(key, i)
        params[n] = {
            "w": 0.001 * jax.random.normal(k, (d, in_channels), jnp.float32),
            "b": jnp.zeros((d,), jnp.float32),
        }
    return params


if __name__ == "__main__":
    key = jax.random.PRNGKey(0)

    in_channels = 32        # stands in for num_inputs (module hardcodes 2048)
    num_classes = 16        # MODEL.ROI_BOX_HEAD.NUM_CLASSES (small synthetic value)
    proposal_lens = [5, 3]  # two images -> 8 proposals total
    R = sum(proposal_lens)
    H = W = 4

    kx1, kx2, kp = jax.random.split(key, 3)
    x1 = jax.random.normal(kx1, (R, in_channels), jnp.float32)
    x2 = jax.random.normal(kx2, (R, in_channels, H, W), jnp.float32)
    params = init_params(kp, in_channels, num_classes, cls_agnostic_bbox_reg=False)

    (_, _, graph_scores, node_scores,
     ref_logits, bbox_preds) = gcn_predictor_forward(
        x1, x2, proposal_lens, params, training=False)

    jax.block_until_ready((ref_logits, bbox_preds))

    bbox_dim = 4 * num_classes
    assert len(ref_logits) == 3 and all(r.shape == (R, num_classes) for r in ref_logits)
    assert len(bbox_preds) == 3 and all(b.shape == (R, bbox_dim) for b in bbox_preds)
    assert graph_scores == [] and node_scores == []

    # Pure-JAX reference check for the fused linear heads.
    def _ref_linear(x, p):
        return x @ p["w"].T + p["b"]

    for got, name in zip(ref_logits + bbox_preds,
                         ["ref1", "ref2", "ref3",
                          "bbox_pred1", "bbox_pred2", "bbox_pred3"]):
        want = _ref_linear(x1, params[name])
        np.testing.assert_allclose(np.asarray(got), np.asarray(want),
                                   rtol=1e-5, atol=1e-6)

    print("KERNEL_OK")
</pallas_src>

<mosaic_0001>
module attributes {stable_mosaic.version = 11 : i64} {
  func.func @_fused_linear_kernel(%arg0: i32, %arg1: memref<16x32xf32, #tpu.memory_space<vmem>>, %arg2: memref<32x256xf32, #tpu.memory_space<vmem>>, %arg3: memref<1x256xf32, #tpu.memory_space<vmem>>, %arg4: memref<16x256xf32, #tpu.memory_space<vmem>>) attributes {dimension_semantics = [#tpu.dimension_semantics<parallel>], iteration_bounds = array<i64: 1>, scalar_prefetch = 0 : i64, scratch_operands = 0 : i64, tpu.core_type = #tpu.core_type<tc>, window_params = [{transform_indices = @transform_0, window_bounds = array<i64: 16, 32>}, {pipeline_mode = #tpu.pipeline_mode<synchronous>, transform_indices = @transform_1, window_bounds = array<i64: 32, 256>}, {pipeline_mode = #tpu.pipeline_mode<synchronous>, transform_indices = @transform_2, window_bounds = array<i64: 1, 256>}, {transform_indices = @transform_3, window_bounds = array<i64: 16, 256>}]} {
    %c0 = arith.constant 0 : index
    %c0_0 = arith.constant 0 : index
    %0 = vector.load %arg1[%c0, %c0_0] : memref<16x32xf32, #tpu.memory_space<vmem>>, vector<16x32xf32>
    %c0_1 = arith.constant 0 : index
    %c0_2 = arith.constant 0 : index
    %1 = vector.load %arg2[%c0_1, %c0_2] : memref<32x256xf32, #tpu.memory_space<vmem>>, vector<32x256xf32>
    %cst = arith.constant dense<0.000000e+00> : vector<16x256xf32>
    %2 = tpu.matmul %0, %1, %cst {dimension_numbers = #tpu.dot_dimension_numbers<[1], [0], [0], [1], [0, 0, 1, 1], [], []>} : vector<16x32xf32>, vector<32x256xf32>, vector<16x256xf32> -> vector<16x256xf32>
    %c0_3 = arith.constant 0 : index
    %c0_4 = arith.constant 0 : index
    %3 = vector.load %arg3[%c0_3, %c0_4] : memref<1x256xf32, #tpu.memory_space<vmem>>, vector<1x256xf32>
    %4 = vector.broadcast %3 : vector<1x256xf32> to vector<16x256xf32>
    %5 = arith.addf %2, %4 : vector<16x256xf32>
    %c0_5 = arith.constant 0 : index
    %c0_6 = arith.constant 0 : index
    %6 = vector.load %arg4[%c0_5, %c0_6] : memref<16x256xf32, #tpu.memory_space<vmem>>, vector<16x256xf32>
    tpu.vector_store %arg4[%c0_5, %c0_6], %5 {strides = array<i32>} : memref<16x256xf32, #tpu.memory_space<vmem>>, vector<16x256xf32>,
    return
  }
  func.func @transform_0(%arg0: i32) -> (i32, i32) {
    %c0_i32 = arith.constant 0 : i32
    %c0_i32_0 = arith.constant 0 : i32
    return %arg0, %c0_i32 : i32, i32
  }
  func.func @transform_1(%arg0: i32) -> (i32, i32) {
    %c0_i32 = arith.constant 0 : i32
    %c0_i32_0 = arith.constant 0 : i32
    %c0_i32_1 = arith.constant 0 : i32
    return %c0_i32, %c0_i32_0 : i32, i32
  }
  func.func @transform_2(%arg0: i32) -> (i32, i32) {
    %c0_i32 = arith.constant 0 : i32
    %c0_i32_0 = arith.constant 0 : i32
    %c0_i32_1 = arith.constant 0 : i32
    return %c0_i32, %c0_i32_0 : i32, i32
  }
  func.func @transform_3(%arg0: i32) -> (i32, i32) {
    %c0_i32 = arith.constant 0 : i32
    %c0_i32_0 = arith.constant 0 : i32
    return %arg0, %c0_i32 : i32, i32
  }
}

</mosaic_0001>

<llo_original>
// kernel: tpu_custom_call.1
$region0: #{tpu_custom_call.1}
  #allocation0 [shape = 'u32[]', space=smem, size = 0x4, offset = 0x4, fixed_abs, tag = 'smem constant byte address 0x4 - core index']
  #allocation1 [shape = 'u32[72,128]{1,0:T(1,128)}', space=vmem, size = 0x9000, scoped, tag = 'internal scratch']
  %s0 = inlined_call_operand.hbm [shape: f32[16,32], index: 0, kind: input, shape index: {}]
  %s1 = inlined_call_operand.hbm [shape: f32[32,256], index: 1, kind: input, shape index: {}]
  %s2 = inlined_call_operand.hbm [shape: f32[1,256], index: 2, kind: input, shape index: {}]
  %s3 = inlined_call_operand.hbm [shape: f32[16,256], index: 3, kind: output, shape index: {}]
  %s4 = sld [smem:[#allocation0]]
  $region34: #{tpu_custom_call.1} parent=0
    _
  %s6 = ssub.s32 1, %s4
  %s7 = scalar_select 0, %s6, %s4
  $region1: #{tpu_custom_call.1} parent=0
    #allocation2 [shape = 'u8[8192]{0}', space=vmem, size = 0x2000, scoped, tag = 'input window, operand 0, single buffered']
    #allocation3 [shape = 's32[1]{0}', space=sflag, size = 0x4, scoped, tag = 'scoped memory for tpu_custom_call.1']
    #allocation4 [shape = 's32[1]{0}', space=sflag, size = 0x4, scoped, tag = 'scoped memory for tpu_custom_call.1']
    #allocation5 [shape = 'u8[32768]{0}', space=vmem, size = 0x8000, scoped, tag = 'input window, operand 1, single buffered']
    #allocation6 [shape = 's32[1]{0}', space=sflag, size = 0x4, scoped, tag = 'scoped memory for tpu_custom_call.1']
    #allocation7 [shape = 'u8[1024]{0}', space=vmem, size = 0x400, scoped, tag = 'input window, operand 2, single buffered']
    #allocation8 [shape = 'u8[16384]{0}', space=vmem, size = 0x4000, scoped, tag = 'output window, operand 0, single buffered']
    %8 = vsyncpa [#allocation3], 0
    %9 = vsyncpa [#allocation6], 0
    %10 = vsyncpa [#allocation4], 0
    // Predicated region
    $region2: #{tpu_custom_call.1} parent=1 // pred_check
      _
    $region3: #{tpu_custom_call.1} parent=1 // pred_check_branch
      %12 = sbr.rel (0) target = $region5
    $region4: #{tpu_custom_call.1} parent=1 // pred_region
      %14 = vsyncadd [#allocation3], 0
      %s15 = sshll.u32 %s0, 4
      %s16 = int_to_ptr.hbm [resolvable:$true] %s15
      %s17 = sshll.u32 [#allocation2], 4
      %s18 = int_to_ptr.vmem [resolvable:$true] %s17
      %23 = dma.hbm_to_vmem [thread:$0]  %s16, 256, %s18, [#allocation3], 128, 128, 8
    $region5: #{tpu_custom_call.1} parent=1 // pred_fallthru
      _
    // Predicated region
    $region6: #{tpu_custom_call.1} parent=1 // pred_check
      _
    $region7: #{tpu_custom_call.1} parent=1 // pred_check_branch
      %25 = sbr.rel (0) target = $region9
    $region8: #{tpu_custom_call.1} parent=1 // pred_region
      %27 = vsyncadd [#allocation6], 0
      %s28 = sshll.u32 %s1, 4
      %s29 = int_to_ptr.hbm [resolvable:$true] %s28
      %s30 = sshll.u32 [#allocation5], 4
      %s31 = int_to_ptr.vmem [resolvable:$true] %s30
      %36 = dma.hbm_to_vmem [thread:$0]  %s29, 1024, %s31, [#allocation6], 256, 256, 16
    $region9: #{tpu_custom_call.1} parent=1 // pred_fallthru
      _
    // Predicated region
    $region10: #{tpu_custom_call.1} parent=1 // pred_check
      _
    $region11: #{tpu_custom_call.1} parent=1 // pred_check_branch
      %38 = sbr.rel (0) target = $region13
    $region12: #{tpu_custom_call.1} parent=1 // pred_region
      %40 = vsyncadd [#allocation6], 0
      %s42 = sshll.u32 %s2, 4
      %s43 = int_to_ptr.hbm [resolvable:$true] %s42
      %s44 = sshll.u32 [#allocation7], 4
      %s45 = int_to_ptr.vmem [resolvable:$true] %s44
      %47 = dma.hbm_to_vmem [thread:$0]  %s43, 32, %s45, [#allocation6]
    $region13: #{tpu_custom_call.1} parent=1 // pred_fallthru
      _
    // Predicated region
    $region14: #{tpu_custom_call.1} parent=1 // pred_check
      _
    $region15: #{tpu_custom_call.1} parent=1 // pred_check_branch
      %49 = sbr.rel (0) target = $region17
    $region16: #{tpu_custom_call.1} parent=1 // pred_region
      %51 = dma.done [#allocation3], 256
    $region17: #{tpu_custom_call.1} parent=1 // pred_fallthru
      _
    // Predicated region
    $region18: #{tpu_custom_call.1} parent=1 // pred_check
      _
    $region19: #{tpu_custom_call.1} parent=1 // pred_check_branch
      %53 = sbr.rel (0) target = $region21
    $region20: #{tpu_custom_call.1} parent=1 // pred_region
      %55 = dma.done [#allocation6], 1024
    $region21: #{tpu_custom_call.1} parent=1 // pred_fallthru
      _
    // Predicated region
    $region22: #{tpu_custom_call.1} parent=1 // pred_check
      _
    $region23: #{tpu_custom_call.1} parent=1 // pred_check_branch
      %57 = sbr.rel (0) target = $region25
    $region24: #{tpu_custom_call.1} parent=1 // pred_region
      %59 = dma.done [#allocation6], 32
    $region25: #{tpu_custom_call.1} parent=1 // pred_fallthru
      _
    %v60 = vld [vmem:[#allocation2] sm:$0xff]
    %v61 = vld [vmem:[#allocation2 + $0x8] sm:$0xff]
    %v62 = vld [vmem:[#allocation5] sm:$0xff]
    %v63 = vld [vmem:[#allocation5 + $0x8] sm:$0xff]
    %v64 = vld [vmem:[#allocation5 + $0x10] sm:$0xff]
    %v65 = vld [vmem:[#allocation5 + $0x18] sm:$0xff]
    %v66 = vld [vmem:[#allocation5 + $0x20] sm:$0xff]
    %v67 = vld [vmem:[#allocation5 + $0x28] sm:$0xff]
    %v68 = vld [vmem:[#allocation5 + $0x30] sm:$0xff]
    %v69 = vld [vmem:[#allocation5 + $0x38] sm:$0xff]
    %v70 = vld [vmem:[#allocation7] sm:$0x3]
    %v72 = vperm.slane %v70, 0
    %v73 = vperm.slane %v70, 1
    %vm76 = vcmask 261120
    %v78 = vsel %vm76, %v60, 0
    %v81 = vsel %vm76, %v61, 0
    %83 = vmatpush.msra.mxu0 0.0
    %84 = vmatpush.msra.mxu0 0.0
    %85 = vmatpush.msra.mxu0 0.0
    %86 = vmatpush.msra.mxu0 0.0
    %87 = vmatpush.msra.mxu0 0.0
    %88 = vmatpush.msra.mxu0 0.0
    %89 = vmatpush.msra.mxu0 0.0
    %90 = vmatpush.msra.mxu0 0.0
    %91 = vmatpush.msra.mxu0 0.0
    %92 = vmatpush.msra.mxu0 0.0
    %93 = vmatpush.msra.mxu0 0.0
    %94 = vmatpush.msra.mxu0 0.0
    %95 = vmatpush.msra.mxu0 %v68
    %96 = vmatpush.msra.mxu0 %v66
    %97 = vmatpush.msra.mxu0 %v64
    %98 = vmatpush.msra.mxu0 %v62
    %99 = vmatmul.f32.gmra.mxu0 %v78
    %v100 = vpop.f32.mrf.mxu0
    %v101 = vadd.f32 %v72, %v100
    %102 = vmatmul.f32.gmra.mxu0 %v81
    %v103 = vpop.f32.mrf.mxu0
    %v104 = vadd.f32 %v72, %v103
    %105 = vdwg.mxu0
    %106 = vmatpush.msra.mxu0 0.0
    %107 = vmatpush.msra.mxu0 0.0
    %108 = vmatpush.msra.mxu0 0.0
    %109 = vmatpush.msra.mxu0 0.0
    %110 = vmatpush.msra.mxu0 0.0
    %111 = vmatpush.msra.mxu0 0.0
    %112 = vmatpush.msra.mxu0 0.0
    %113 = vmatpush.msra.mxu0 0.0
    %114 = vmatpush.msra.mxu0 0.0
    %115 = vmatpush.msra.mxu0 0.0
    %116 = vmatpush.msra.mxu0 0.0
    %117 = vmatpush.msra.mxu0 0.0
    %118 = vmatpush.msra.mxu0 %v69
    %119 = vmatpush.msra.mxu0 %v67
    %120 = vmatpush.msra.mxu0 %v65
    %121 = vmatpush.msra.mxu0 %v63
    %122 = vmatmul.f32.gmra.mxu0 %v78
    %v123 = vpop.f32.mrf.mxu0
    %v124 = vadd.f32 %v73, %v123
    %125 = vmatmul.f32.gmra.mxu0 %v81
    %v126 = vpop.f32.mrf.mxu0
    %v127 = vadd.f32 %v73, %v126
    %128 = vdwg.mxu0
    %129 = vst [vmem:[#allocation8] sm:$0xff] %v101
    %130 = vst [vmem:[#allocation8 + $0x8] sm:$0xff] %v124
    %131 = vst [vmem:[#allocation8 + $0x10] sm:$0xff] %v104
    %132 = vst [vmem:[#allocation8 + $0x18] sm:$0xff] %v127
    // Predicated region
    $region26: #{tpu_custom_call.1} parent=1 // pred_check
      _
    $region27: #{tpu_custom_call.1} parent=1 // pred_check_branch
      %134 = sbr.rel (0) target = $region29
    $region28: #{tpu_custom_call.1} parent=1 // pred_region
      %136 = vsyncadd [#allocation4], 0
      %s137 = sshll.u32 [#allocation8], 4
      %s138 = int_to_ptr.vmem [resolvable:$true] %s137
      %s139 = sshll.u32 %s3, 4
      %s140 = int_to_ptr.hbm [resolvable:$true] %s139
      %145 = dma.vmem_to_hbm [thread:$0]  %s138, 512, %s140, [#allocation4], 256, 256, 16
    $region29: #{tpu_custom_call.1} parent=1 // pred_fallthru
      _
    // Predicated region
    $region30: #{tpu_custom_call.1} parent=1 // pred_check
      _
    $region31: #{tpu_custom_call.1} parent=1 // pred_check_branch
      %147 = sbr.rel (0) target = $region33
    $region32: #{tpu_custom_call.1} parent=1 // pred_region
      %149 = dma.done [#allocation4], 512
    $region33: #{tpu_custom_call.1} parent=1 // pred_fallthru
      _
    %150 = vsyncpa [#allocation3], 1
    %151 = vsyncpa [#allocation6], 1
    %152 = vsyncpa [#allocation4], 1

</llo_original>
